<compile_context>
chip_gen: v6e
topology: v6e:2x2x1
jax: 0.10.0
libtpu: 0.0.40
codegen_flags: <defaults>
</compile_context>

<pallas_src>
import jax
import jax.numpy as jnp
from jax.experimental import pallas as pl
from jax.experimental.pallas import tpu as pltpu

INPUT_SIZE = 784
HIDDEN_SIZE = 500
OUTPUT_SIZE = 10
PADDED_OUT = 128  # lane-dense output width (multiple of 128)


def _mnist_kernel(x_ref, wf_ref, o_ref):
    # x_ref:  [TB, 784]
    # wf_ref: [784, 128]   (= W1.T @ W2.T, zero-padded on the lane axis)
    # o_ref:  [TB, 128]
    o_ref[...] = jnp.dot(
        x_ref[...], wf_ref[...], preferred_element_type=jnp.float32
    ).astype(o_ref.dtype)


def simple_mnist_forward(x, w1, w2, *, tb=512):
    """x: [B, 784] f32, w1: [500, 784] f32, w2: [10, 500] f32 -> [B, 10] f32."""
    B = x.shape[0]

    # Fuse the two linears into a single [784, 10] weight, then pad the output
    # (lane) dimension to 128 so the kernel's stores are unmasked.
    # (Under jit this folds into a tiny one-time op; in a real deployment Wf
    # would be precomputed once outside the hot path.)
    wf = jnp.dot(w1.T, w2.T)                                      # [784, 10]
    wf = jnp.pad(wf, ((0, 0), (0, PADDED_OUT - OUTPUT_SIZE)))     # [784, 128]

    # Batch tile: multiple of 8 sublanes, capped at tb; pad B up to a multiple.
    tb = max(8, min(tb, B))
    tb = (tb // 8) * 8
    n_blocks = pl.cdiv(B, tb)
    Bp = n_blocks * tb
    xp = x if Bp == B else jnp.pad(x, ((0, Bp - B), (0, 0)))

    logits_padded = pl.pallas_call(
        _mnist_kernel,
        out_shape=jax.ShapeDtypeStruct((Bp, PADDED_OUT), jnp.float32),
        grid=(n_blocks,),
        in_specs=[
            pl.BlockSpec((tb, INPUT_SIZE), lambda i: (i, 0)),
            pl.BlockSpec((INPUT_SIZE, PADDED_OUT), lambda i: (0, 0)),
        ],
        out_specs=pl.BlockSpec((tb, PADDED_OUT), lambda i: (i, 0)),
        compiler_params=pltpu.CompilerParams(
            dimension_semantics=("parallel",),
        ),
    )(xp, wf)

    # Slice away lane/batch padding, then softmax over dim=0 (batch axis),
    # matching nn.Softmax(dim=0). Done wrapper-side so the kernel's batch axis
    # can be tiled and run in parallel; this [B, 10] op is negligible in XLA.
    logits = logits_padded[:B, :OUTPUT_SIZE]
    return jax.nn.softmax(logits, axis=0)


def _reference(x, w1, w2):
    logits = (x @ w1.T) @ w2.T
    m = jnp.max(logits, axis=0, keepdims=True)
    e = jnp.exp(logits - m)
    return e / jnp.sum(e, axis=0, keepdims=True)


if __name__ == "__main__":
    key = jax.random.PRNGKey(0)
    kx, k1, k2 = jax.random.split(key, 3)

    B = 8  # small batch
    x = jax.random.normal(kx, (B, INPUT_SIZE), dtype=jnp.float32)

    # Deterministic parameter init (PyTorch-style uniform bounds, fixed seed).
    bound1 = 1.0 / (INPUT_SIZE ** 0.5)
    bound2 = 1.0 / (HIDDEN_SIZE ** 0.5)
    w1 = jax.random.uniform(k1, (HIDDEN_SIZE, INPUT_SIZE), jnp.float32,
                            minval=-bound1, maxval=bound1)
    w2 = jax.random.uniform(k2, (OUTPUT_SIZE, HIDDEN_SIZE), jnp.float32,
                            minval=-bound2, maxval=bound2)

    fwd = jax.jit(simple_mnist_forward)
    out = fwd(x, w1, w2)
    out = jax.block_until_ready(out)

    ref = _reference(x, w1, w2)
    assert out.shape == (B, OUTPUT_SIZE)
    # Weight fusion reassociates the FP contraction; allow a slightly looser
    # tolerance than bit-exact (well within numerical noise for softmax probs).
    assert jnp.allclose(out, ref, atol=1e-4, rtol=1e-4), "mismatch vs reference"
    # Softmax over dim=0: each column sums to 1.
    assert jnp.allclose(jnp.sum(out, axis=0), jnp.ones((OUTPUT_SIZE,)), atol=1e-5)

    print("KERNEL_OK")
</pallas_src>

<mosaic_0001>
module attributes {stable_mosaic.version = 11 : i64} {
  func.func @_mnist_kernel(%arg0: i32, %arg1: memref<8x784xf32, #tpu.memory_space<vmem>>, %arg2: memref<784x128xf32, #tpu.memory_space<vmem>>, %arg3: memref<8x128xf32, #tpu.memory_space<vmem>>) attributes {dimension_semantics = [#tpu.dimension_semantics<parallel>], iteration_bounds = array<i64: 1>, scalar_prefetch = 0 : i64, scratch_operands = 0 : i64, tpu.core_type = #tpu.core_type<tc>, window_params = [{transform_indices = @transform_0, window_bounds = array<i64: 8, 784>}, {pipeline_mode = #tpu.pipeline_mode<synchronous>, transform_indices = @transform_1, window_bounds = array<i64: 784, 128>}, {transform_indices = @transform_2, window_bounds = array<i64: 8, 128>}]} {
    %c0 = arith.constant 0 : index
    %c0_0 = arith.constant 0 : index
    %0 = vector.load %arg1[%c0, %c0_0] : memref<8x784xf32, #tpu.memory_space<vmem>>, vector<8x784xf32>
    %c0_1 = arith.constant 0 : index
    %c0_2 = arith.constant 0 : index
    %1 = vector.load %arg2[%c0_1, %c0_2] : memref<784x128xf32, #tpu.memory_space<vmem>>, vector<784x128xf32>
    %cst = arith.constant dense<0.000000e+00> : vector<8x128xf32>
    %2 = tpu.matmul %0, %1, %cst {dimension_numbers = #tpu.dot_dimension_numbers<[1], [0], [0], [1], [0, 0, 1, 1], [], []>} : vector<8x784xf32>, vector<784x128xf32>, vector<8x128xf32> -> vector<8x128xf32>
    %c0_3 = arith.constant 0 : index
    %c0_4 = arith.constant 0 : index
    %3 = vector.load %arg3[%c0_3, %c0_4] : memref<8x128xf32, #tpu.memory_space<vmem>>, vector<8x128xf32>
    tpu.vector_store %arg3[%c0_3, %c0_4], %2 {strides = array<i32>} : memref<8x128xf32, #tpu.memory_space<vmem>>, vector<8x128xf32>,
    return
  }
  func.func @transform_0(%arg0: i32) -> (i32, i32) {
    %c0_i32 = arith.constant 0 : i32
    %c0_i32_0 = arith.constant 0 : i32
    return %arg0, %c0_i32 : i32, i32
  }
  func.func @transform_1(%arg0: i32) -> (i32, i32) {
    %c0_i32 = arith.constant 0 : i32
    %c0_i32_0 = arith.constant 0 : i32
    %c0_i32_1 = arith.constant 0 : i32
    return %c0_i32, %c0_i32_0 : i32, i32
  }
  func.func @transform_2(%arg0: i32) -> (i32, i32) {
    %c0_i32 = arith.constant 0 : i32
    %c0_i32_0 = arith.constant 0 : i32
    return %arg0, %c0_i32 : i32, i32
  }
}

</mosaic_0001>

<llo_original>
// kernel: simple_mnist_forward.1
$region0: #{simple_mnist_forward.1}
  #allocation0 [shape = 'u32[]', space=smem, size = 0x4, offset = 0x4, fixed_abs, tag = 'smem constant byte address 0x4 - core index']
  #allocation1 [shape = 'u32[144,128]{1,0:T(1,128)}', space=vmem, size = 0x12000, scoped, tag = 'internal scratch']
  %s0 = inlined_call_operand.vmem [shape: f32[8,784], index: 0, kind: input, shape index: {}]
  %s1 = inlined_call_operand.vmem [shape: f32[784,128], index: 1, kind: input, shape index: {}]
  %s2 = inlined_call_operand.vmem [shape: f32[8,128], index: 2, kind: output, shape index: {}]
  %s3 = sld [smem:[#allocation0]]
  $region18: #{simple_mnist_forward.1} parent=0
    _
  %s5 = ssub.s32 1, %s3
  %s6 = scalar_select 0, %s5, %s3
  // Predicated region
  $region2: #{simple_mnist_forward.1} parent=0 // pred_check
    _
  $region3: #{simple_mnist_forward.1} parent=0 // pred_check_branch
    %8 = sbr.rel (0) target = $region5
  $region4: #{simple_mnist_forward.1} parent=0 // pred_region
    _
  $region5: #{simple_mnist_forward.1} parent=0 // pred_fallthru
    _
  // Predicated region
  $region6: #{simple_mnist_forward.1} parent=0 // pred_check
    _
  $region7: #{simple_mnist_forward.1} parent=0 // pred_check_branch
    %10 = sbr.rel (0) target = $region9
  $region8: #{simple_mnist_forward.1} parent=0 // pred_region
    _
  $region9: #{simple_mnist_forward.1} parent=0 // pred_fallthru
    _
  %v11 = vld [vmem:[%s0] sm:$0xff]
  %v12 = vld [vmem:[%s0 + $0x8] sm:$0xff]
  %v13 = vld [vmem:[%s0 + $0x10] sm:$0xff]
  %v14 = vld [vmem:[%s0 + $0x18] sm:$0xff]
  %v15 = vld [vmem:[%s0 + $0x20] sm:$0xff]
  %v16 = vld [vmem:[%s0 + $0x28] sm:$0xff]
  %v17 = vld [vmem:[%s0 + $0x30] sm:$0xff]
  %v18 = vld [vmem:[%s1] sm:$0xff]
  %v19 = vld [vmem:[%s1 + $0x8] sm:$0xff]
  %v20 = vld [vmem:[%s1 + $0x10] sm:$0xff]
  %v21 = vld [vmem:[%s1 + $0x18] sm:$0xff]
  %v22 = vld [vmem:[%s1 + $0x20] sm:$0xff]
  %v23 = vld [vmem:[%s1 + $0x28] sm:$0xff]
  %v24 = vld [vmem:[%s1 + $0x30] sm:$0xff]
  %v25 = vld [vmem:[%s1 + $0x38] sm:$0xff]
  %v26 = vld [vmem:[%s1 + $0x40] sm:$0xff]
  %v27 = vld [vmem:[%s1 + $0x48] sm:$0xff]
  %v28 = vld [vmem:[%s1 + $0x50] sm:$0xff]
  %v29 = vld [vmem:[%s1 + $0x58] sm:$0xff]
  %v30 = vld [vmem:[%s1 + $0x60] sm:$0xff]
  %v31 = vld [vmem:[%s1 + $0x68] sm:$0xff]
  %v32 = vld [vmem:[%s1 + $0x70] sm:$0xff]
  %v33 = vld [vmem:[%s1 + $0x78] sm:$0xff]
  %v34 = vld [vmem:[%s1 + $0x80] sm:$0xff]
  %v35 = vld [vmem:[%s1 + $0x88] sm:$0xff]
  %v36 = vld [vmem:[%s1 + $0x90] sm:$0xff]
  %v37 = vld [vmem:[%s1 + $0x98] sm:$0xff]
  %v38 = vld [vmem:[%s1 + $0xa0] sm:$0xff]
  %v39 = vld [vmem:[%s1 + $0xa8] sm:$0xff]
  %v40 = vld [vmem:[%s1 + $0xb0] sm:$0xff]
  %v41 = vld [vmem:[%s1 + $0xb8] sm:$0xff]
  %v42 = vld [vmem:[%s1 + $0xc0] sm:$0xff]
  %v43 = vld [vmem:[%s1 + $0xc8] sm:$0xff]
  %v44 = vld [vmem:[%s1 + $0xd0] sm:$0xff]
  %v45 = vld [vmem:[%s1 + $0xd8] sm:$0xff]
  %v46 = vld [vmem:[%s1 + $0xe0] sm:$0xff]
  %v47 = vld [vmem:[%s1 + $0xe8] sm:$0xff]
  %v48 = vld [vmem:[%s1 + $0xf0] sm:$0xff]
  %v49 = vld [vmem:[%s1 + $0xf8] sm:$0xff]
  %v50 = vld [vmem:[%s1 + $0x100] sm:$0xff]
  %v51 = vld [vmem:[%s1 + $0x108] sm:$0xff]
  %v52 = vld [vmem:[%s1 + $0x110] sm:$0xff]
  %v53 = vld [vmem:[%s1 + $0x118] sm:$0xff]
  %v54 = vld [vmem:[%s1 + $0x120] sm:$0xff]
  %v55 = vld [vmem:[%s1 + $0x128] sm:$0xff]
  %v56 = vld [vmem:[%s1 + $0x130] sm:$0xff]
  %v57 = vld [vmem:[%s1 + $0x138] sm:$0xff]
  %v58 = vld [vmem:[%s1 + $0x140] sm:$0xff]
  %v59 = vld [vmem:[%s1 + $0x148] sm:$0xff]
  %v60 = vld [vmem:[%s1 + $0x150] sm:$0xff]
  %v61 = vld [vmem:[%s1 + $0x158] sm:$0xff]
  %v62 = vld [vmem:[%s1 + $0x160] sm:$0xff]
  %v63 = vld [vmem:[%s1 + $0x168] sm:$0xff]
  %v64 = vld [vmem:[%s1 + $0x170] sm:$0xff]
  %v65 = vld [vmem:[%s1 + $0x178] sm:$0xff]
  %v66 = vld [vmem:[%s1 + $0x180] sm:$0xff]
  %v67 = vld [vmem:[%s1 + $0x188] sm:$0xff]
  %v68 = vld [vmem:[%s1 + $0x190] sm:$0xff]
  %v69 = vld [vmem:[%s1 + $0x198] sm:$0xff]
  %v70 = vld [vmem:[%s1 + $0x1a0] sm:$0xff]
  %v71 = vld [vmem:[%s1 + $0x1a8] sm:$0xff]
  %v72 = vld [vmem:[%s1 + $0x1b0] sm:$0xff]
  %v73 = vld [vmem:[%s1 + $0x1b8] sm:$0xff]
  %v74 = vld [vmem:[%s1 + $0x1c0] sm:$0xff]
  %v75 = vld [vmem:[%s1 + $0x1c8] sm:$0xff]
  %v76 = vld [vmem:[%s1 + $0x1d0] sm:$0xff]
  %v77 = vld [vmem:[%s1 + $0x1d8] sm:$0xff]
  %v78 = vld [vmem:[%s1 + $0x1e0] sm:$0xff]
  %v79 = vld [vmem:[%s1 + $0x1e8] sm:$0xff]
  %v80 = vld [vmem:[%s1 + $0x1f0] sm:$0xff]
  %v81 = vld [vmem:[%s1 + $0x1f8] sm:$0xff]
  %v82 = vld [vmem:[%s1 + $0x200] sm:$0xff]
  %v83 = vld [vmem:[%s1 + $0x208] sm:$0xff]
  %v84 = vld [vmem:[%s1 + $0x210] sm:$0xff]
  %v85 = vld [vmem:[%s1 + $0x218] sm:$0xff]
  %v86 = vld [vmem:[%s1 + $0x220] sm:$0xff]
  %v87 = vld [vmem:[%s1 + $0x228] sm:$0xff]
  %v88 = vld [vmem:[%s1 + $0x230] sm:$0xff]
  %v89 = vld [vmem:[%s1 + $0x238] sm:$0xff]
  %v90 = vld [vmem:[%s1 + $0x240] sm:$0xff]
  %v91 = vld [vmem:[%s1 + $0x248] sm:$0xff]
  %v92 = vld [vmem:[%s1 + $0x250] sm:$0xff]
  %v93 = vld [vmem:[%s1 + $0x258] sm:$0xff]
  %v94 = vld [vmem:[%s1 + $0x260] sm:$0xff]
  %v95 = vld [vmem:[%s1 + $0x268] sm:$0xff]
  %v96 = vld [vmem:[%s1 + $0x270] sm:$0xff]
  %v97 = vld [vmem:[%s1 + $0x278] sm:$0xff]
  %v98 = vld [vmem:[%s1 + $0x280] sm:$0xff]
  %v99 = vld [vmem:[%s1 + $0x288] sm:$0xff]
  %v100 = vld [vmem:[%s1 + $0x290] sm:$0xff]
  %v101 = vld [vmem:[%s1 + $0x298] sm:$0xff]
  %v102 = vld [vmem:[%s1 + $0x2a0] sm:$0xff]
  %v103 = vld [vmem:[%s1 + $0x2a8] sm:$0xff]
  %v104 = vld [vmem:[%s1 + $0x2b0] sm:$0xff]
  %v105 = vld [vmem:[%s1 + $0x2b8] sm:$0xff]
  %v106 = vld [vmem:[%s1 + $0x2c0] sm:$0xff]
  %v107 = vld [vmem:[%s1 + $0x2c8] sm:$0xff]
  %v108 = vld [vmem:[%s1 + $0x2d0] sm:$0xff]
  %v109 = vld [vmem:[%s1 + $0x2d8] sm:$0xff]
  %v110 = vld [vmem:[%s1 + $0x2e0] sm:$0xff]
  %v111 = vld [vmem:[%s1 + $0x2e8] sm:$0xff]
  %v112 = vld [vmem:[%s1 + $0x2f0] sm:$0xff]
  %v113 = vld [vmem:[%s1 + $0x2f8] sm:$0xff]
  %v114 = vld [vmem:[%s1 + $0x300] sm:$0xff]
  %v115 = vld [vmem:[%s1 + $0x308] sm:$0xff]
  %vm116 = vcmask 130048
  %v118 = vsel %vm116, %v17, 0
  %120 = vmatprep.subr.mxu0 0.0
  %121 = vmatpush1.msra.mxu0 %v33
  %122 = vmatprep.subr.mxu0 0.0
  %123 = vmatpush1.msra.mxu0 %v32
  %124 = vmatprep.subr.mxu0 0.0
  %125 = vmatpush1.msra.mxu0 %v31
  %126 = vmatprep.subr.mxu0 0.0
  %127 = vmatpush1.msra.mxu0 %v30
  %128 = vmatprep.subr.mxu0 0.0
  %129 = vmatpush1.msra.mxu0 %v29
  %130 = vmatprep.subr.mxu0 0.0
  %131 = vmatpush1.msra.mxu0 %v28
  %132 = vmatprep.subr.mxu0 0.0
  %133 = vmatpush1.msra.mxu0 %v27
  %134 = vmatprep.subr.mxu0 0.0
  %135 = vmatpush1.msra.mxu0 %v26
  %136 = vmatprep.subr.mxu0 0.0
  %137 = vmatpush1.msra.mxu0 %v25
  %138 = vmatprep.subr.mxu0 0.0
  %139 = vmatpush1.msra.mxu0 %v24
  %140 = vmatprep.subr.mxu0 0.0
  %141 = vmatpush1.msra.mxu0 %v23
  %142 = vmatprep.subr.mxu0 0.0
  %143 = vmatpush1.msra.mxu0 %v22
  %144 = vmatprep.subr.mxu0 0.0
  %145 = vmatpush1.msra.mxu0 %v21
  %146 = vmatprep.subr.mxu0 0.0
  %147 = vmatpush1.msra.mxu0 %v20
  %148 = vmatprep.subr.mxu0 0.0
  %149 = vmatpush1.msra.mxu0 %v19
  %150 = vmatprep.subr.mxu0 0.0
  %151 = vmatpush1.msra.mxu0 %v18
  %152 = vmatprep.subr.mxu0 0.0
  %153 = vmatpush2.msra.mxu0 %v49
  %154 = vmatprep.subr.mxu0 0.0
  %155 = vmatpush2.msra.mxu0 %v48
  %156 = vmatprep.subr.mxu0 0.0
  %157 = vmatpush2.msra.mxu0 %v47
  %158 = vmatprep.subr.mxu0 0.0
  %159 = vmatpush2.msra.mxu0 %v46
  %160 = vmatprep.subr.mxu0 0.0
  %161 = vmatpush2.msra.mxu0 %v45
  %162 = vmatprep.subr.mxu0 0.0
  %163 = vmatpush2.msra.mxu0 %v44
  %164 = vmatprep.subr.mxu0 0.0
  %165 = vmatpush2.msra.mxu0 %v43
  %166 = vmatprep.subr.mxu0 0.0
  %167 = vmatpush2.msra.mxu0 %v42
  %168 = vmatprep.subr.mxu0 0.0
  %169 = vmatpush2.msra.mxu0 %v41
  %170 = vmatprep.subr.mxu0 0.0
  %171 = vmatpush2.msra.mxu0 %v40
  %172 = vmatprep.subr.mxu0 0.0
  %173 = vmatpush2.msra.mxu0 %v39
  %174 = vmatprep.subr.mxu0 0.0
  %175 = vmatpush2.msra.mxu0 %v38
  %176 = vmatprep.subr.mxu0 0.0
  %177 = vmatpush2.msra.mxu0 %v37
  %178 = vmatprep.subr.mxu0 0.0
  %179 = vmatpush2.msra.mxu0 %v36
  %180 = vmatprep.subr.mxu0 0.0
  %181 = vmatpush2.msra.mxu0 %v35
  %182 = vmatprep.subr.mxu0 0.0
  %183 = vmatpush2.msra.mxu0 %v34
  %184 = vmatprep.mubr.f32.mxu0 %v12
  %185 = vmatmul.mubr.f32.gmra.mxu0 %v11
  %v186 = vpop.f32.mrf.mxu0
  %v187 = vadd.f32 0.0, %v186
  %v188 = vpop.f32.mrf.mxu0
  %189 = vdwg.mxu0
  %190 = vmatprep.subr.mxu0 0.0
  %191 = vmatpush1.msra.mxu0 %v65
  %192 = vmatprep.subr.mxu0 0.0
  %193 = vmatpush1.msra.mxu0 %v64
  %194 = vmatprep.subr.mxu0 0.0
  %195 = vmatpush1.msra.mxu0 %v63
  %196 = vmatprep.subr.mxu0 0.0
  %197 = vmatpush1.msra.mxu0 %v62
  %198 = vmatprep.subr.mxu0 0.0
  %199 = vmatpush1.msra.mxu0 %v61
  %200 = vmatprep.subr.mxu0 0.0
  %201 = vmatpush1.msra.mxu0 %v60
  %202 = vmatprep.subr.mxu0 0.0
  %203 = vmatpush1.msra.mxu0 %v59
  %204 = vmatprep.subr.mxu0 0.0
  %205 = vmatpush1.msra.mxu0 %v58
  %206 = vmatprep.subr.mxu0 0.0
  %207 = vmatpush1.msra.mxu0 %v57
  %208 = vmatprep.subr.mxu0 0.0
  %209 = vmatpush1.msra.mxu0 %v56
  %210 = vmatprep.subr.mxu0 0.0
  %211 = vmatpush1.msra.mxu0 %v55
  %212 = vmatprep.subr.mxu0 0.0
  %213 = vmatpush1.msra.mxu0 %v54
  %214 = vmatprep.subr.mxu0 0.0
  %215 = vmatpush1.msra.mxu0 %v53
  %216 = vmatprep.subr.mxu0 0.0
  %217 = vmatpush1.msra.mxu0 %v52
  %218 = vmatprep.subr.mxu0 0.0
  %219 = vmatpush1.msra.mxu0 %v51
  %220 = vmatprep.subr.mxu0 0.0
  %221 = vmatpush1.msra.mxu0 %v50
  %222 = vmatprep.subr.mxu0 0.0
  %223 = vmatpush2.msra.mxu0 %v81
  %224 = vmatprep.subr.mxu0 0.0
  %225 = vmatpush2.msra.mxu0 %v80
  %226 = vmatprep.subr.mxu0 0.0
  %227 = vmatpush2.msra.mxu0 %v79
  %228 = vmatprep.subr.mxu0 0.0
  %229 = vmatpush2.msra.mxu0 %v78
  %230 = vmatprep.subr.mxu0 0.0
  %231 = vmatpush2.msra.mxu0 %v77
  %232 = vmatprep.subr.mxu0 0.0
  %233 = vmatpush2.msra.mxu0 %v76
  %234 = vmatprep.subr.mxu0 0.0
  %235 = vmatpush2.msra.mxu0 %v75
  %236 = vmatprep.subr.mxu0 0.0
  %237 = vmatpush2.msra.mxu0 %v74
  %238 = vmatprep.subr.mxu0 0.0
  %239 = vmatpush2.msra.mxu0 %v73
  %240 = vmatprep.subr.mxu0 0.0
  %241 = vmatpush2.msra.mxu0 %v72
  %242 = vmatprep.subr.mxu0 0.0
  %243 = vmatpush2.msra.mxu0 %v71
  %244 = vmatprep.subr.mxu0 0.0
  %245 = vmatpush2.msra.mxu0 %v70
  %246 = vmatprep.subr.mxu0 0.0
  %247 = vmatpush2.msra.mxu0 %v69
  %248 = vmatprep.subr.mxu0 0.0
  %249 = vmatpush2.msra.mxu0 %v68
  %250 = vmatprep.subr.mxu0 0.0
  %251 = vmatpush2.msra.mxu0 %v67
  %252 = vmatprep.subr.mxu0 0.0
  %253 = vmatpush2.msra.mxu0 %v66
  %254 = vmatprep.mubr.f32.mxu0 %v14
  %255 = vmatmul.mubr.f32.gmra.mxu0 %v13
  %v256 = vpop.f32.mrf.mxu0
  %v257 = vadd.f32 %v187, %v256
  %v258 = vpop.f32.mrf.mxu0
  %259 = vdwg.mxu0
  %260 = vmatprep.subr.mxu0 0.0
  %261 = vmatpush1.msra.mxu0 %v97
  %262 = vmatprep.subr.mxu0 0.0
  %263 = vmatpush1.msra.mxu0 %v96
  %264 = vmatprep.subr.mxu0 0.0
  %265 = vmatpush1.msra.mxu0 %v95
  %266 = vmatprep.subr.mxu0 0.0
  %267 = vmatpush1.msra.mxu0 %v94
  %268 = vmatprep.subr.mxu0 0.0
  %269 = vmatpush1.msra.mxu0 %v93
  %270 = vmatprep.subr.mxu0 0.0
  %271 = vmatpush1.msra.mxu0 %v92
  %272 = vmatprep.subr.mxu0 0.0
  %273 = vmatpush1.msra.mxu0 %v91
  %274 = vmatprep.subr.mxu0 0.0
  %275 = vmatpush1.msra.mxu0 %v90
  %276 = vmatprep.subr.mxu0 0.0
  %277 = vmatpush1.msra.mxu0 %v89
  %278 = vmatprep.subr.mxu0 0.0
  %279 = vmatpush1.msra.mxu0 %v88
  %280 = vmatprep.subr.mxu0 0.0
  %281 = vmatpush1.msra.mxu0 %v87
  %282 = vmatprep.subr.mxu0 0.0
  %283 = vmatpush1.msra.mxu0 %v86
  %284 = vmatprep.subr.mxu0 0.0
  %285 = vmatpush1.msra.mxu0 %v85
  %286 = vmatprep.subr.mxu0 0.0
  %287 = vmatpush1.msra.mxu0 %v84
  %288 = vmatprep.subr.mxu0 0.0
  %289 = vmatpush1.msra.mxu0 %v83
  %290 = vmatprep.subr.mxu0 0.0
  %291 = vmatpush1.msra.mxu0 %v82
  %292 = vmatprep.subr.mxu0 0.0
  %293 = vmatpush2.msra.mxu0 %v113
  %294 = vmatprep.subr.mxu0 0.0
  %295 = vmatpush2.msra.mxu0 %v112
  %296 = vmatprep.subr.mxu0 0.0
  %297 = vmatpush2.msra.mxu0 %v111
  %298 = vmatprep.subr.mxu0 0.0
  %299 = vmatpush2.msra.mxu0 %v110
  %300 = vmatprep.subr.mxu0 0.0
  %301 = vmatpush2.msra.mxu0 %v109
  %302 = vmatprep.subr.mxu0 0.0
  %303 = vmatpush2.msra.mxu0 %v108
  %304 = vmatprep.subr.mxu0 0.0
  %305 = vmatpush2.msra.mxu0 %v107
  %306 = vmatprep.subr.mxu0 0.0
  %307 = vmatpush2.msra.mxu0 %v106
  %308 = vmatprep.subr.mxu0 0.0
  %309 = vmatpush2.msra.mxu0 %v105
  %310 = vmatprep.subr.mxu0 0.0
  %311 = vmatpush2.msra.mxu0 %v104
  %312 = vmatprep.subr.mxu0 0.0
  %313 = vmatpush2.msra.mxu0 %v103
  %314 = vmatprep.subr.mxu0 0.0
  %315 = vmatpush2.msra.mxu0 %v102
  %316 = vmatprep.subr.mxu0 0.0
  %317 = vmatpush2.msra.mxu0 %v101
  %318 = vmatprep.subr.mxu0 0.0
  %319 = vmatpush2.msra.mxu0 %v100
  %320 = vmatprep.subr.mxu0 0.0
  %321 = vmatpush2.msra.mxu0 %v99
  %322 = vmatprep.subr.mxu0 0.0
  %323 = vmatpush2.msra.mxu0 %v98
  %324 = vmatprep.mubr.f32.mxu0 %v16
  %325 = vmatmul.mubr.f32.gmra.mxu0 %v15
  %v326 = vpop.f32.mrf.mxu0
  %v327 = vadd.f32 %v257, %v326
  %v328 = vpop.f32.mrf.mxu0
  %329 = vdwg.mxu0
  %330 = vmatprep.subr.mxu0 0.0
  %331 = vmatpush1.msra.mxu0 0.0
  %332 = vmatprep.subr.mxu0 0.0
  %333 = vmatpush1.msra.mxu0 0.0
  %334 = vmatprep.subr.mxu0 0.0
  %335 = vmatpush1.msra.mxu0 0.0
  %336 = vmatprep.subr.mxu0 0.0
  %337 = vmatpush1.msra.mxu0 0.0
  %338 = vmatprep.subr.mxu0 0.0
  %339 = vmatpush1.msra.mxu0 0.0
  %340 = vmatprep.subr.mxu0 0.0
  %341 = vmatpush1.msra.mxu0 0.0
  %342 = vmatprep.subr.mxu0 0.0
  %343 = vmatpush1.msra.mxu0 0.0
  %344 = vmatprep.subr.mxu0 0.0
  %345 = vmatpush1.msra.mxu0 0.0
  %346 = vmatprep.subr.mxu0 0.0
  %347 = vmatpush1.msra.mxu0 0.0
  %348 = vmatprep.subr.mxu0 0.0
  %349 = vmatpush1.msra.mxu0 0.0
  %350 = vmatprep.subr.mxu0 0.0
  %351 = vmatpush1.msra.mxu0 0.0
  %352 = vmatprep.subr.mxu0 0.0
  %353 = vmatpush1.msra.mxu0 0.0
  %354 = vmatprep.subr.mxu0 0.0
  %355 = vmatpush1.msra.mxu0 0.0
  %356 = vmatprep.subr.mxu0 0.0
  %357 = vmatpush1.msra.mxu0 0.0
  %358 = vmatprep.subr.mxu0 0.0
  %359 = vmatpush1.msra.mxu0 %v115
  %360 = vmatprep.subr.mxu0 0.0
  %361 = vmatpush1.msra.mxu0 %v114
  %362 = vmatprep.subr.mxu0 0.0
  %363 = vmatpush2.msra.mxu0 0.0
  %364 = vmatprep.subr.mxu0 0.0
  %365 = vmatpush2.msra.mxu0 0.0
  %366 = vmatprep.subr.mxu0 0.0
  %367 = vmatpush2.msra.mxu0 0.0
  %368 = vmatprep.subr.mxu0 0.0
  %369 = vmatpush2.msra.mxu0 0.0
  %370 = vmatprep.subr.mxu0 0.0
  %371 = vmatpush2.msra.mxu0 0.0
  %372 = vmatprep.subr.mxu0 0.0
  %373 = vmatpush2.msra.mxu0 0.0
  %374 = vmatprep.subr.mxu0 0.0
  %375 = vmatpush2.msra.mxu0 0.0
  %376 = vmatprep.subr.mxu0 0.0
  %377 = vmatpush2.msra.mxu0 0.0
  %378 = vmatprep.subr.mxu0 0.0
  %379 = vmatpush2.msra.mxu0 0.0
  %380 = vmatprep.subr.mxu0 0.0
  %381 = vmatpush2.msra.mxu0 0.0
  %382 = vmatprep.subr.mxu0 0.0
  %383 = vmatpush2.msra.mxu0 0.0
  %384 = vmatprep.subr.mxu0 0.0
  %385 = vmatpush2.msra.mxu0 0.0
  %386 = vmatprep.subr.mxu0 0.0
  %387 = vmatpush2.msra.mxu0 0.0
  %388 = vmatprep.subr.mxu0 0.0
  %389 = vmatpush2.msra.mxu0 0.0
  %390 = vmatprep.subr.mxu0 0.0
  %391 = vmatpush2.msra.mxu0 0.0
  %392 = vmatprep.subr.mxu0 0.0
  %393 = vmatpush2.msra.mxu0 0.0
  %394 = vmatprep.mubr.f32.mxu0 0.0
  %395 = vmatmul.mubr.f32.gmra.mxu0 %v118
  %v396 = vpop.f32.mrf.mxu0
  %v397 = vadd.f32 %v327, %v396
  %v398 = vpop.f32.mrf.mxu0
  %399 = vdwg.mxu0
  %400 = vst [vmem:[%s2] sm:$0xff] %v397
  // Predicated region
  $region10: #{simple_mnist_forward.1} parent=0 // pred_check
    _
  $region11: #{simple_mnist_forward.1} parent=0 // pred_check_branch
    %402 = sbr.rel (0) target = $region13
  $region12: #{simple_mnist_forward.1} parent=0 // pred_region
    _
  $region13: #{simple_mnist_forward.1} parent=0 // pred_fallthru
    _
  // Predicated region
  $region14: #{simple_mnist_forward.1} parent=0 // pred_check
    _
  $region15: #{simple_mnist_forward.1} parent=0 // pred_check_branch
    %404 = sbr.rel (0) target = $region17
  $region16: #{simple_mnist_forward.1} parent=0 // pred_region
    _
  $region17: #{simple_mnist_forward.1} parent=0 // pred_fallthru
    _

</llo_original>
